<compile_context>
chip_gen: v7x
topology: tpu7x:2x2x1
jax: 0.10.0
libtpu: 0.0.40
codegen_flags: <defaults>
</compile_context>

<pallas_src>
import functools

import numpy as np
import jax
import jax.numpy as jnp
from jax import lax
from jax.experimental import pallas as pl
from jax.experimental.pallas import tpu as pltpu


def _round_up(a, b):
    return (a + b - 1) // b * b


def _ldam_tile_body(x, tgt, m_list, s):
    """Shared per-tile math. Returns (nll, mask, valid) with nll (TB,1)."""
    col = lax.broadcasted_iota(jnp.int32, x.shape, 1)        # (TB, Cp)
    mask = col == tgt                                        # bool one-hot
    valid = tgt >= 0                                         # (TB, 1), False on pad rows

    # Gather target logit and per-sample margin with masked reductions
    # (no float one_hot materialization).
    x_tgt = jnp.sum(jnp.where(mask, x, 0.0), axis=-1, keepdims=True)       # (TB,1)
    batch_m = jnp.sum(jnp.where(mask, m_list, 0.0), axis=-1, keepdims=True)

    # output = where(one_hot, x - batch_m, x);  z = s * output
    z = s * jnp.where(mask, x - batch_m, x)                  # (TB, Cp)
    z_tgt = s * (x_tgt - batch_m)                            # reuse the x-side gather

    # numerically stable logsumexp over the (full, padded) class axis
    z_max = jnp.max(z, axis=-1, keepdims=True)
    lse = z_max + jnp.log(jnp.sum(jnp.exp(z - z_max), axis=-1, keepdims=True))
    nll = lse - z_tgt                                        # (TB, 1)
    return nll, mask, valid


def _ldam_kernel_unweighted(x_ref, tgt_ref, m_ref, num_ref, *, s):
    x = x_ref[...]                       # (TB, Cp) f32
    tgt = tgt_ref[...]                   # (TB, 1) i32
    m_list = m_ref[...]                  # (1, Cp) f32

    nll, _, valid = _ldam_tile_body(x, tgt, m_list, s)
    partial = jnp.sum(jnp.where(valid, nll, 0.0))            # tile-partial numerator

    # lane-dense (1,1,128) broadcast write -> unmasked vst, parallel-friendly
    num_ref[...] = jnp.zeros(num_ref.shape, jnp.float32) + partial


def _ldam_kernel_weighted(x_ref, tgt_ref, m_ref, w_ref, num_ref, den_ref, *, s):
    x = x_ref[...]
    tgt = tgt_ref[...]
    m_list = m_ref[...]
    weight = w_ref[...]                  # (1, Cp) f32, zero-padded

    nll, mask, _ = _ldam_tile_body(x, tgt, m_list, s)
    w_i = jnp.sum(jnp.where(mask, weight, 0.0), axis=-1, keepdims=True)   # (TB,1)
    # pad rows have mask all-False -> w_i = 0 -> contribute nothing.
    num_ref[...] = jnp.zeros(num_ref.shape, jnp.float32) + jnp.sum(w_i * nll)
    den_ref[...] = jnp.zeros(den_ref.shape, jnp.float32) + jnp.sum(w_i)


def ldam_loss(x, target, m_list, s, weight=None):
    """x: (B, C) f32 logits; target: (B,) int; m_list: (C,) f32; weight: (C,) f32 or None."""
    B, C = x.shape
    Cp = _round_up(C, 128)                      # lane-dense class axis

    # Batch tile: big enough to pipeline, small enough for v7x's 64 MiB VMEM
    # (double-buffered x tile kept under ~8 MiB).
    TB = min(512, _round_up(B, 8))
    while TB > 8 and 2 * TB * Cp * 4 > 8 * 2**20:
        TB //= 2
    TB = _round_up(TB, 8)
    B_pad = _round_up(B, TB)
    num_tiles = B_pad // TB

    NEG = jnp.float32(-1e9)                     # exp(s*NEG - max) == 0 exactly
    x_p = jnp.pad(x.astype(jnp.float32), ((0, B_pad - B), (0, Cp - C)),
                  constant_values=NEG)
    tgt_p = jnp.pad(target.astype(jnp.int32), (0, B_pad - B),
                    constant_values=-1).reshape(B_pad, 1)
    m_p = jnp.pad(m_list.astype(jnp.float32), (0, Cp - C)).reshape(1, Cp)

    compiler_params = pltpu.CompilerParams(
        dimension_semantics=("parallel",),      # megacore-shardable on v7x
        vmem_limit_bytes=32 * 1024 * 1024,
    )

    x_spec = pl.BlockSpec((TB, Cp), lambda i: (i, 0))
    tgt_spec = pl.BlockSpec((TB, 1), lambda i: (i, 0))
    vec_spec = pl.BlockSpec((1, Cp), lambda i: (0, 0))        # resident across tiles
    part_shape = jax.ShapeDtypeStruct((num_tiles, 1, 128), jnp.float32)
    part_spec = pl.BlockSpec((1, 1, 128), lambda i: (i, 0, 0))

    if weight is None:
        num_out = pl.pallas_call(
            functools.partial(_ldam_kernel_unweighted, s=float(s)),
            out_shape=part_shape,
            grid=(num_tiles,),
            in_specs=[x_spec, tgt_spec, vec_spec],
            out_specs=part_spec,
            compiler_params=compiler_params,
        )(x_p, tgt_p, m_p)
        return jnp.sum(num_out[:, 0, 0]) / jnp.float32(B)

    w_p = jnp.pad(weight.astype(jnp.float32), (0, Cp - C)).reshape(1, Cp)
    num_out, den_out = pl.pallas_call(
        functools.partial(_ldam_kernel_weighted, s=float(s)),
        out_shape=(part_shape, part_shape),
        grid=(num_tiles,),
        in_specs=[x_spec, tgt_spec, vec_spec, vec_spec],
        out_specs=(part_spec, part_spec),
        compiler_params=compiler_params,
    )(x_p, tgt_p, m_p, w_p)
    return jnp.sum(num_out[:, 0, 0]) / jnp.sum(den_out[:, 0, 0])


def _reference(x, target, m_list, s, weight=None):
    """Pure-JAX reference mirroring the PyTorch module."""
    B, C = x.shape
    one_hot = jax.nn.one_hot(target, C, dtype=jnp.float32)
    batch_m = (one_hot * m_list[None, :]).sum(-1, keepdims=True)
    out = jnp.where(one_hot > 0, x - batch_m, x)
    z = s * out
    logp = jax.nn.log_softmax(z, axis=-1)
    nll = -jnp.take_along_axis(logp, target[:, None], axis=1)[:, 0]
    if weight is None:
        return nll.mean()
    w = weight[target]
    return (w * nll).sum() / w.sum()


if __name__ == "__main__":
    key = jax.random.PRNGKey(0)
    B, C = 8, 16            # batch, num_classes
    max_m, s = 0.5, 30.0

    # Deterministic class-count list -> LDAM per-class margins
    cls_num_list = np.array([100, 80, 60, 50, 40, 30, 25, 20,
                             15, 12, 10, 8, 6, 5, 3, 2], dtype=np.float64)
    m_np = 1.0 / np.sqrt(np.sqrt(cls_num_list))
    m_np = m_np * (max_m / np.max(m_np))
    m_list = jnp.asarray(m_np, dtype=jnp.float32)

    kx, kt = jax.random.split(key)
    x = jax.random.normal(kx, (B, C), dtype=jnp.float32)
    target = jax.random.randint(kt, (B,), 0, C, dtype=jnp.int32)

    # weight=None path (specialized kernel, denominator = B)
    loss = jax.block_until_ready(ldam_loss(x, target, m_list, s, weight=None))
    ref = _reference(x, target, m_list, s, weight=None)
    assert jnp.allclose(loss, ref, rtol=1e-5, atol=1e-5), (loss, ref)

    # weighted path (per-class inverse-frequency weights)
    w = jnp.asarray(1.0 / cls_num_list, dtype=jnp.float32)
    loss_w = jax.block_until_ready(ldam_loss(x, target, m_list, s, weight=w))
    ref_w = _reference(x, target, m_list, s, weight=w)
    assert jnp.allclose(loss_w, ref_w, rtol=1e-5, atol=1e-5), (loss_w, ref_w)

    print("KERNEL_OK")
</pallas_src>

<mosaic_0001>
module attributes {stable_mosaic.version = 11 : i64} {
  func.func @_ldam_kernel_unweighted(%arg0: i32, %arg1: memref<8x128xf32, #tpu.memory_space<vmem>>, %arg2: memref<8x1xi32, #tpu.memory_space<vmem>>, %arg3: memref<1x128xf32, #tpu.memory_space<vmem>>, %arg4: memref<1x1x128xf32, #tpu.memory_space<vmem>>) attributes {dimension_semantics = [#tpu.dimension_semantics<parallel>], iteration_bounds = array<i64: 1>, scalar_prefetch = 0 : i64, scratch_operands = 0 : i64, tpu.core_type = #tpu.core_type<tc>, window_params = [{transform_indices = @transform_0, window_bounds = array<i64: 8, 128>}, {transform_indices = @transform_1, window_bounds = array<i64: 8, 1>}, {pipeline_mode = #tpu.pipeline_mode<synchronous>, transform_indices = @transform_2, window_bounds = array<i64: 1, 128>}, {transform_indices = @transform_3, window_bounds = array<i64: 1, 1, 128>}]} {
    %c0 = arith.constant 0 : index
    %c0_0 = arith.constant 0 : index
    %0 = vector.load %arg1[%c0, %c0_0] : memref<8x128xf32, #tpu.memory_space<vmem>>, vector<8x128xf32>
    %c0_1 = arith.constant 0 : index
    %c0_2 = arith.constant 0 : index
    %1 = vector.load %arg2[%c0_1, %c0_2] : memref<8x1xi32, #tpu.memory_space<vmem>>, vector<8x1xi32>
    %c0_3 = arith.constant 0 : index
    %c0_4 = arith.constant 0 : index
    %2 = vector.load %arg3[%c0_3, %c0_4] : memref<1x128xf32, #tpu.memory_space<vmem>>, vector<1x128xf32>
    %3 = tpu.iota {dimensions = array<i32: 1>} : vector<8x128xi32>
    %4 = vector.broadcast %1 : vector<8x1xi32> to vector<8x128xi32>
    %5 = arith.cmpi eq, %3, %4 : vector<8x128xi32>
    %c0_i32 = arith.constant 0 : i32
    %6 = vector.broadcast %c0_i32 : i32 to vector<8x1xi32>
    %7 = arith.cmpi sge, %1, %6 : vector<8x1xi32>
    %cst = arith.constant 0.000000e+00 : f32
    %8 = vector.broadcast %cst : f32 to vector<8x128xf32>
    %9 = arith.select %5, %0, %8 : vector<8x128xi1>, vector<8x128xf32>
    %cst_5 = arith.constant dense<0.000000e+00> : vector<8xf32>
    %10 = vector.multi_reduction <add>, %9, %cst_5 [1] : vector<8x128xf32> to vector<8xf32>
    %11 = vector.shape_cast %10 : vector<8xf32> to vector<8x1xf32>
    %cst_6 = arith.constant 0.000000e+00 : f32
    %12 = vector.shape_cast %2 : vector<1x128xf32> to vector<1x128xf32>
    %13 = vector.broadcast %12 : vector<1x128xf32> to vector<8x128xf32>
    %14 = vector.broadcast %cst_6 : f32 to vector<8x128xf32>
    %15 = arith.select %5, %13, %14 : vector<8x128xi1>, vector<8x128xf32>
    %cst_7 = arith.constant dense<0.000000e+00> : vector<8xf32>
    %16 = vector.multi_reduction <add>, %15, %cst_7 [1] : vector<8x128xf32> to vector<8xf32>
    %17 = vector.shape_cast %16 : vector<8xf32> to vector<8x1xf32>
    %18 = vector.broadcast %17 : vector<8x1xf32> to vector<8x128xf32>
    %19 = arith.subf %0, %18 : vector<8x128xf32>
    %20 = arith.select %5, %19, %0 : vector<8x128xi1>, vector<8x128xf32>
    %cst_8 = arith.constant 3.000000e+01 : f32
    %21 = vector.broadcast %cst_8 : f32 to vector<8x128xf32>
    %22 = arith.mulf %21, %20 : vector<8x128xf32>
    %23 = arith.subf %11, %17 : vector<8x1xf32>
    %cst_9 = arith.constant 3.000000e+01 : f32
    %24 = vector.broadcast %cst_9 : f32 to vector<8x1xf32>
    %25 = arith.mulf %24, %23 : vector<8x1xf32>
    %cst_10 = arith.constant dense<0xFF800000> : vector<8xf32>
    %26 = vector.multi_reduction <maximumf>, %22, %cst_10 [1] : vector<8x128xf32> to vector<8xf32>
    %27 = vector.shape_cast %26 : vector<8xf32> to vector<8x1xf32>
    %28 = vector.broadcast %27 : vector<8x1xf32> to vector<8x128xf32>
    %29 = arith.subf %22, %28 : vector<8x128xf32>
    %30 = math.exp %29 : vector<8x128xf32>
    %cst_11 = arith.constant dense<0.000000e+00> : vector<8xf32>
    %31 = vector.multi_reduction <add>, %30, %cst_11 [1] : vector<8x128xf32> to vector<8xf32>
    %32 = vector.shape_cast %31 : vector<8xf32> to vector<8x1xf32>
    %33 = math.log %32 : vector<8x1xf32>
    %34 = arith.addf %27, %33 : vector<8x1xf32>
    %35 = arith.subf %34, %25 : vector<8x1xf32>
    %cst_12 = arith.constant 0.000000e+00 : f32
    %36 = vector.broadcast %cst_12 : f32 to vector<8x1xf32>
    %37 = arith.select %7, %35, %36 : vector<8x1xi1>, vector<8x1xf32>
    %38 = vector.shape_cast %37 : vector<8x1xf32> to vector<1x8x1xf32>
    %cst_13 = arith.constant dense<0.000000e+00> : vector<1xf32>
    %39 = vector.multi_reduction <add>, %38, %cst_13 [1, 2] : vector<1x8x1xf32> to vector<1xf32>
    %40 = vector.shape_cast %39 : vector<1xf32> to vector<1x1x1xf32>
    %41 = vector.extract %40[0, 0, 0] : f32 from vector<1x1x1xf32>
    %cst_14 = arith.constant 0.000000e+00 : f32
    %42 = vector.broadcast %cst_14 : f32 to vector<1x1x128xf32>
    %43 = vector.broadcast %41 : f32 to vector<1x1x128xf32>
    %44 = arith.addf %42, %43 : vector<1x1x128xf32>
    %c0_15 = arith.constant 0 : index
    %c0_16 = arith.constant 0 : index
    %c0_17 = arith.constant 0 : index
    %45 = vector.load %arg4[%c0_15, %c0_16, %c0_17] : memref<1x1x128xf32, #tpu.memory_space<vmem>>, vector<1x1x128xf32>
    tpu.vector_store %arg4[%c0_15, %c0_16, %c0_17], %44 {strides = array<i32>} : memref<1x1x128xf32, #tpu.memory_space<vmem>>, vector<1x1x128xf32>,
    return
  }
  func.func @transform_0(%arg0: i32) -> (i32, i32) {
    %c0_i32 = arith.constant 0 : i32
    %c0_i32_0 = arith.constant 0 : i32
    return %arg0, %c0_i32 : i32, i32
  }
  func.func @transform_1(%arg0: i32) -> (i32, i32) {
    %c0_i32 = arith.constant 0 : i32
    %c0_i32_0 = arith.constant 0 : i32
    return %arg0, %c0_i32 : i32, i32
  }
  func.func @transform_2(%arg0: i32) -> (i32, i32) {
    %c0_i32 = arith.constant 0 : i32
    %c0_i32_0 = arith.constant 0 : i32
    %c0_i32_1 = arith.constant 0 : i32
    return %c0_i32, %c0_i32_0 : i32, i32
  }
  func.func @transform_3(%arg0: i32) -> (i32, i32, i32) {
    %c0_i32 = arith.constant 0 : i32
    %c0_i32_0 = arith.constant 0 : i32
    %c0_i32_1 = arith.constant 0 : i32
    return %arg0, %c0_i32, %c0_i32_0 : i32, i32, i32
  }
}

</mosaic_0001>

<llo_original>
// kernel: tpu_custom_call.1
$region0: #{tpu_custom_call.1}
  #allocation0 [shape = 'u32[]', space=smem, size = 0x4, offset = 0x4, fixed_abs, tag = 'smem constant byte address 0x4 - core index']
  #allocation1 [shape = 'u32[144,128]{1,0:T(1,128)}', space=vmem, size = 0x12000, scoped, tag = 'internal scratch']
  %s0 = inlined_call_operand.vmem [shape: f32[8,128], index: 0, kind: input, shape index: {}]
  %s1 = inlined_call_operand.vmem [shape: s32[8,1], index: 1, kind: input, shape index: {}]
  %s2 = inlined_call_operand.vmem [shape: f32[1,128], index: 2, kind: input, shape index: {}]
  %s3 = inlined_call_operand.hbm [shape: f32[1,1,128], index: 3, kind: output, shape index: {}]
  %s4 = sld [smem:[#allocation0]]
  $region22: #{tpu_custom_call.1} parent=0
    _
  %s6 = ssub.s32 1, %s4
  %s7 = scalar_select 0, %s6, %s4
  $region1: #{tpu_custom_call.1} parent=0
    #allocation2 [shape = 'u8[512]{0}', space=vmem, size = 0x400, scoped, tag = 'output window, operand 0, single buffered']
    #allocation3 [shape = 's32[1]{0}', space=sflag, size = 0x4, scoped, tag = 'scoped memory for tpu_custom_call.1']
    %8 = vsyncpa [#allocation3], 0
    // Predicated region
    $region2: #{tpu_custom_call.1} parent=1 // pred_check
      _
    $region3: #{tpu_custom_call.1} parent=1 // pred_check_branch
      %10 = sbr.rel (0) target = $region5
    $region4: #{tpu_custom_call.1} parent=1 // pred_region
      _
    $region5: #{tpu_custom_call.1} parent=1 // pred_fallthru
      _
    // Predicated region
    $region6: #{tpu_custom_call.1} parent=1 // pred_check
      _
    $region7: #{tpu_custom_call.1} parent=1 // pred_check_branch
      %12 = sbr.rel (0) target = $region9
    $region8: #{tpu_custom_call.1} parent=1 // pred_region
      _
    $region9: #{tpu_custom_call.1} parent=1 // pred_fallthru
      _
    // Predicated region
    $region10: #{tpu_custom_call.1} parent=1 // pred_check
      _
    $region11: #{tpu_custom_call.1} parent=1 // pred_check_branch
      %14 = sbr.rel (0) target = $region13
    $region12: #{tpu_custom_call.1} parent=1 // pred_region
      _
    $region13: #{tpu_custom_call.1} parent=1 // pred_fallthru
      _
    %v15 = vld [vmem:[%s0] sm:$0xff]
    %v16 = vld [vmem:[%s1] sm:$0xff]
    %v17 = vld [vmem:[%s2] sm:$0x1]
    %v18 = vlaneseq
    %v19 = vand.u32 %v18, 127
    %20 = vset.pattern.permute.xlu0 0
    %21 = vperm.xlu0 %20, %v16
    %v22 = vpop.permute.xlu0 %21
    %vm23 = vcmp.eq.s32.totalorder %v19, %v22
    %vm24 = vcmp.ge.s32.totalorder %v16, 0
    %v25 = vsel %vm23, %v15, 0.0
    %26 = vadd.xlane.f32.xlu0 %v25
    %v27 = vpop.xlane.xlu0 %26
    %v29 = vlaneseq
    %v30 = vshrl.u32 %v29, 7
    %v31 = vsub.s32 0, %v30
    %v32 = vrot.slane %v17, %v31
    %v34 = vsel %vm23, %v32, 0.0
    %35 = vadd.xlane.f32.xlu0 %v34
    %v36 = vpop.xlane.xlu0 %35
    %v37 = vsub.f32 %v15, %v36
    %v38 = vsel %vm23, %v37, %v15
    %v39 = vmul.f32 %v38, 30.0
    %v40 = vsub.f32 %v27, %v36
    %v41 = vmul.f32 %v40, 30.0
    %42 = vmax.xlane.f32.xlu0 %v39
    %v43 = vpop.xlane.xlu0 %42
    %v44 = vsub.f32 %v39, %v43
    %v45 = vmul.f32 %v44, 1.442695
    %v46 = vpow.pop %v45
    %47 = vadd.xlane.f32.xlu0 %v46
    %v48 = vpop.xlane.xlu0 %47
    %v49 = vlog2.pop %v48
    %v50 = vmul.f32 %v49, 0.6931472
    %v51 = vadd.f32 %v43, %v50
    %v52 = vsub.f32 %v51, %v41
    %v53 = vsel %vm24, %v52, 0.0
    %vm54 = vcmask 7168
    %v55 = vsel %vm54, %v53, 0.0
    %56 = vadd.xlane.f32.xlu0 %v55
    %v57 = vpop.xlane.xlu0 %56
    %v58 = vrot.slane %v57, 4
    %v59 = vadd.f32 %v57, %v58
    %v60 = vrot.slane %v59, 2
    %v61 = vadd.f32 %v59, %v60
    %v62 = vrot.slane %v61, 1
    %v63 = vadd.f32 %v61, %v62
    %s64 = vtos %v63
    %v65 = vstv %s64
    %v66 = vadd.f32 %v65, 0.0
    %67 = vst [vmem:[#allocation2] sm:$0x1] %v66
    // Predicated region
    $region14: #{tpu_custom_call.1} parent=1 // pred_check
      _
    $region15: #{tpu_custom_call.1} parent=1 // pred_check_branch
      %69 = sbr.rel (0) target = $region17
    $region16: #{tpu_custom_call.1} parent=1 // pred_region
      %s71 = ssub.s32 16, 16
      %72 = vsyncadd [#allocation3], %s71
      %s74 = sshll.u32 [#allocation2], 4
      %s75 = int_to_ptr.vmem [resolvable:$true] %s74
      %77 = dma.vmem_to_hbm [thread:$0]  %s75, 16, %s3, [#allocation3]
    $region17: #{tpu_custom_call.1} parent=1 // pred_fallthru
      _
    // Predicated region
    $region18: #{tpu_custom_call.1} parent=1 // pred_check
      _
    $region19: #{tpu_custom_call.1} parent=1 // pred_check_branch
      %79 = sbr.rel (0) target = $region21
    $region20: #{tpu_custom_call.1} parent=1 // pred_region
      %80 = dma.done [#allocation3], 16
    $region21: #{tpu_custom_call.1} parent=1 // pred_fallthru
      _
    %81 = vsyncpa [#allocation3], 1

</llo_original>
